<compile_context>
chip_gen: v5e
topology: v5e:2x2
jax: 0.10.0
libtpu: 0.0.40
codegen_flags: <defaults>
</compile_context>

<pallas_src>
import functools

import jax
import jax.numpy as jnp
from jax import lax
from jax.experimental import pallas as pl
from jax.experimental.pallas import tpu as pltpu


def _round_up(x: int, m: int) -> int:
    return (x + m - 1) // m * m


def _neural_block_kernel(seed_ref, x_ref, w_ref, b_ref, o_ref, *acc_scratch,
                         with_dropout: bool, p: float, neg_slope: float = 0.2):
    # f32 outputs double as the accumulator (output block stays resident across the
    # K grid axis); otherwise a dedicated f32 VMEM scratch is supplied.
    acc_ref = acc_scratch[0] if acc_scratch else o_ref

    k = pl.program_id(2)
    nk = pl.num_programs(2)
    # IMPORTANT: read grid coordinates at kernel top level (not inside pl.when
    # bodies) so the interpret/CPU fallback can rewrite them.
    i = pl.program_id(0)
    j = pl.program_id(1)

    @pl.when(k == 0)
    def _init():
        # Seed the accumulator with the broadcast bias -> no bias add in the epilogue.
        acc_ref[...] = jnp.broadcast_to(b_ref[...].astype(jnp.float32), acc_ref.shape)

    # Inner loop: pure MXU work, f32 accumulation.
    acc_ref[...] += jnp.dot(x_ref[...], w_ref[...],
                            preferred_element_type=jnp.float32)

    # Epilogue (dropout + LeakyReLU) only once per output tile, on the last K step.
    @pl.when(k == nk - 1)
    def _epilogue():
        y = acc_ref[...]

        if with_dropout and p > 0.0:
            tm, tn = y.shape
            # Counter-based hash of the *global* (row, col) coordinates + seed.
            # Row/col terms are (tm,1)/(1,tn) strips broadcast-added (cheaper than
            # two full-tile iota+mul), then mixed with a lowbias32-style mixer.
            # Pure VPU integer ops; also lowers under interpret mode.
            # TODO(synk): not bit-compatible with PyTorch's Dropout RNG stream; on
            # hardware this could switch to pltpu.prng_seed/prng_random_bits.
            rows = (lax.broadcasted_iota(jnp.int32, (tm, 1), 0) + i * tm).astype(jnp.uint32)
            cols = (lax.broadcasted_iota(jnp.int32, (1, tn), 1) + j * tn).astype(jnp.uint32)
            h = (rows * jnp.uint32(0x9E3779B1)
                 + cols * jnp.uint32(0x85EBCA77)
                 + seed_ref[0].astype(jnp.uint32))
            h = h ^ (h >> 16)
            h = h * jnp.uint32(0x7FEB352D)
            h = h ^ (h >> 15)
            h = h * jnp.uint32(0x846CA68B)
            h = h ^ (h >> 16)
            # Integer-threshold compare (no int->float convert): P(drop) ~= p.
            thresh = jnp.int32(min(int(round(p * (1 << 31))), (1 << 31) - 1))
            keep = (h >> 1).astype(jnp.int32) >= thresh
            y = jnp.where(keep, y * (1.0 / (1.0 - p)), 0.0)

        # LeakyReLU(0.2): for 0 < slope < 1, max(y, slope*y) == leaky_relu(y).
        o_ref[...] = jnp.maximum(y, neg_slope * y).astype(o_ref.dtype)


def neural_block(x, w, b, *, with_dropout: bool, dropout_p: float, seed: int = 0,
                 tm: int = 256, tn: int = 512, tk: int = 512,
                 compute_dtype=jnp.bfloat16):
    """x: (B, in_dim), w: (in_dim, out_dim), b: (out_dim,)."""
    B, in_dim = x.shape
    k2, out_dim = w.shape
    assert k2 == in_dim
    if with_dropout and not (0.0 <= float(dropout_p) < 1.0):
        raise ValueError(f"dropout_p must be in [0, 1), got {dropout_p}")
    out_dtype = x.dtype

    # Reduced-precision MXU operands (bf16 default: MXU-native on v5e/v6e/v7x and
    # halves x/W HBM+VMEM traffic); accumulation stays f32.
    if compute_dtype is not None and jnp.dtype(compute_dtype) != jnp.dtype(x.dtype):
        x = x.astype(compute_dtype)
        w = w.astype(compute_dtype)
    in_itemsize = jnp.dtype(x.dtype).itemsize
    out_itemsize = jnp.dtype(out_dtype).itemsize

    # Lane/sublane-aligned tiles clamped to the (padded) problem size.
    # Sub-32-bit operands pack rows along sublanes: align tm to the native tile.
    sub_m = {4: 8, 2: 16, 1: 32}.get(in_itemsize, 8)
    tm = min(tm, _round_up(B, sub_m))
    tn = min(tn, _round_up(out_dim, 128))
    tk = min(tk, _round_up(in_dim, 128))
    Mp = _round_up(B, tm)
    Np = _round_up(out_dim, tn)
    Kp = _round_up(in_dim, tk)

    # v7x shards the parallel grid axes over 2 TensorCores: if the whole M*N grid is
    # a single tile, split N so both cores get work (harmless on v5e/v6e).
    while (Mp // tm) * (Np // tn) < 2 and tn > 128:
        tn = max(128, _round_up(tn // 2, 128))
        Np = _round_up(out_dim, tn)

    # Zero-pad only when needed (zeros contribute nothing to the matmul; padded
    # rows/cols are sliced off below).  Production: pick 128-multiple dims or
    # pre-pad W once at parameter init so this path is skipped entirely.
    if Mp != B or Kp != in_dim:
        x = jnp.pad(x, ((0, Mp - B), (0, Kp - in_dim)))
    if Kp != in_dim or Np != out_dim:
        w = jnp.pad(w, ((0, Kp - in_dim), (0, Np - out_dim)))
    b2d = b.reshape(1, out_dim).astype(jnp.float32)
    if Np != out_dim:
        b2d = jnp.pad(b2d, ((0, 0), (0, Np - out_dim)))

    seed_arr = jnp.asarray([seed], dtype=jnp.int32)

    # f32 outputs accumulate in place (saves tm*tn*4 bytes of VMEM); otherwise scratch.
    use_out_as_acc = jnp.dtype(out_dtype) == jnp.dtype(jnp.float32)
    scratch_shapes = [] if use_out_as_acc else [pltpu.VMEM((tm, tn), jnp.float32)]

    # Double-buffered footprint -> scoped VMEM limit (x2 headroom, >=32 MiB,
    # capped at 48 MiB so the tiling stays valid on v7x's 64 MiB/TC VMEM).
    buf_bytes = 2 * (tm * tk * in_itemsize + tk * tn * in_itemsize
                     + tm * tn * out_itemsize + tn * 4)
    if not use_out_as_acc:
        buf_bytes += tm * tn * 4
    vmem_limit = int(min(max(2 * buf_bytes, 32 << 20), 48 << 20))

    kernel = functools.partial(_neural_block_kernel,
                               with_dropout=bool(with_dropout), p=float(dropout_p))

    out = pl.pallas_call(
        kernel,
        out_shape=jax.ShapeDtypeStruct((Mp, Np), out_dtype),
        grid_spec=pltpu.PrefetchScalarGridSpec(
            num_scalar_prefetch=1,                                   # seed -> SMEM
            grid=(Mp // tm, Np // tn, Kp // tk),
            in_specs=[
                pl.BlockSpec((tm, tk), lambda i, j, k, s: (i, k)),   # x
                pl.BlockSpec((tk, tn), lambda i, j, k, s: (k, j)),   # W
                pl.BlockSpec((1, tn), lambda i, j, k, s: (0, j)),    # bias
            ],
            out_specs=pl.BlockSpec((tm, tn), lambda i, j, k, s: (i, j)),
            scratch_shapes=scratch_shapes,
        ),
        compiler_params=pltpu.CompilerParams(
            dimension_semantics=("parallel", "parallel", "arbitrary"),
            vmem_limit_bytes=vmem_limit),
    )(seed_arr, x, w, b2d)

    if Mp != B or Np != out_dim:
        out = out[:B, :out_dim]
    return out


def neural_block_ref(x, w, b):
    """Pure-JAX reference (eval mode: dropout is identity)."""
    y = x @ w + b[None, :]
    return jnp.where(y >= 0.0, y, 0.2 * y)


if __name__ == "__main__":
    key = jax.random.PRNGKey(0)
    k_x, k_w, k_b = jax.random.split(key, 3)

    B, in_dim, out_dim = 8, 32, 64
    x = jax.random.normal(k_x, (B, in_dim), dtype=jnp.float32)
    bound = 1.0 / (in_dim ** 0.5)   # PyTorch Linear default init range
    w = jax.random.uniform(k_w, (in_dim, out_dim), jnp.float32, -bound, bound)
    b = jax.random.uniform(k_b, (out_dim,), jnp.float32, -bound, bound)

    ref = neural_block_ref(x, w, b)

    # Case 1: eval mode (no dropout), exact-numerics f32 path -> tight match vs reference.
    out = jax.block_until_ready(
        neural_block(x, w, b, with_dropout=False, dropout_p=0.0,
                     compute_dtype=jnp.float32))
    assert out.shape == (B, out_dim)
    assert jnp.allclose(out, ref, atol=1e-5, rtol=1e-5), "f32 path mismatch vs reference"

    # Case 2: eval mode, default bf16 MXU operands (f32 accumulate) -> loose tolerance.
    out_bf = jax.block_until_ready(
        neural_block(x, w, b, with_dropout=False, dropout_p=0.0))
    assert out_bf.shape == (B, out_dim)
    assert jnp.allclose(out_bf, ref, atol=2e-2, rtol=2e-2), "bf16 path mismatch vs reference"

    # Case 3: training-mode dropout (in-kernel hash mask), f32 path for exact mask/scale check.
    p = 0.3
    out_do = jax.block_until_ready(
        neural_block(x, w, b, with_dropout=True, dropout_p=p, seed=42,
                     compute_dtype=jnp.float32))
    assert out_do.shape == (B, out_dim)
    scaled = ref / (1.0 - p)
    is_zero = jnp.isclose(out_do, 0.0, atol=1e-6)
    is_kept = jnp.isclose(out_do, scaled, atol=1e-4, rtol=1e-4)
    assert bool(jnp.all(is_zero | is_kept)), "dropout output not consistent with mask/scale semantics"
    zero_frac = float(jnp.mean(is_zero))
    assert 0.05 < zero_frac < 0.6, f"drop fraction {zero_frac} implausible for p={p}"

    print("KERNEL_OK")
</pallas_src>

<mosaic_0001>
module attributes {stable_mosaic.version = 11 : i64} {
  func.func @_neural_block_kernel(%arg0: i32, %arg1: i32, %arg2: i32, %arg3: memref<1xi32, #tpu.memory_space<smem>>, %arg4: memref<8x128xf32, #tpu.memory_space<vmem>>, %arg5: memref<128x128xf32, #tpu.memory_space<vmem>>, %arg6: memref<1x128xf32, #tpu.memory_space<vmem>>, %arg7: memref<8x128xf32, #tpu.memory_space<vmem>>) attributes {dimension_semantics = [#tpu.dimension_semantics<parallel>, #tpu.dimension_semantics<parallel>, #tpu.dimension_semantics<arbitrary>], iteration_bounds = array<i64: 1, 1, 1>, scalar_prefetch = 1 : i64, scratch_operands = 0 : i64, tpu.core_type = #tpu.core_type<tc>, window_params = [{transform_indices = @transform_0, window_bounds = array<i64: 8, 128>}, {transform_indices = @transform_1, window_bounds = array<i64: 128, 128>}, {transform_indices = @transform_2, window_bounds = array<i64: 1, 128>}, {transform_indices = @transform_3, window_bounds = array<i64: 8, 128>}]} {
    %c0_i32 = arith.constant 0 : i32
    %0 = arith.cmpi eq, %arg2, %c0_i32 : i32
    %1 = arith.extui %0 : i1 to i32
    %c0_i32_0 = arith.constant 0 : i32
    %2 = arith.cmpi ne, %1, %c0_i32_0 : i32
    scf.if %2 {
      %c0_10 = arith.constant 0 : index
      %c0_11 = arith.constant 0 : index
      %12 = vector.load %arg6[%c0_10, %c0_11] : memref<1x128xf32, #tpu.memory_space<vmem>>, vector<1x128xf32>
      %13 = vector.shape_cast %12 : vector<1x128xf32> to vector<1x128xf32>
      %14 = vector.broadcast %13 : vector<1x128xf32> to vector<8x128xf32>
      %c0_12 = arith.constant 0 : index
      %c0_13 = arith.constant 0 : index
      %15 = vector.load %arg7[%c0_12, %c0_13] : memref<8x128xf32, #tpu.memory_space<vmem>>, vector<8x128xf32>
      tpu.vector_store %arg7[%c0_12, %c0_13], %14 {strides = array<i32>} : memref<8x128xf32, #tpu.memory_space<vmem>>, vector<8x128xf32>,
    } else {
    }
    %c0 = arith.constant 0 : index
    %c0_1 = arith.constant 0 : index
    %3 = vector.load %arg7[%c0, %c0_1] : memref<8x128xf32, #tpu.memory_space<vmem>>, vector<8x128xf32>
    %c0_2 = arith.constant 0 : index
    %c0_3 = arith.constant 0 : index
    %4 = vector.load %arg4[%c0_2, %c0_3] : memref<8x128xf32, #tpu.memory_space<vmem>>, vector<8x128xf32>
    %c0_4 = arith.constant 0 : index
    %c0_5 = arith.constant 0 : index
    %5 = vector.load %arg5[%c0_4, %c0_5] : memref<128x128xf32, #tpu.memory_space<vmem>>, vector<128x128xf32>
    %cst = arith.constant dense<0.000000e+00> : vector<8x128xf32>
    %6 = tpu.matmul %4, %5, %cst {dimension_numbers = #tpu.dot_dimension_numbers<[1], [0], [0], [1], [0, 0, 1, 1], [], []>} : vector<8x128xf32>, vector<128x128xf32>, vector<8x128xf32> -> vector<8x128xf32>
    %7 = arith.addf %3, %6 : vector<8x128xf32>
    %c0_6 = arith.constant 0 : index
    %c0_7 = arith.constant 0 : index
    %8 = vector.load %arg7[%c0_6, %c0_7] : memref<8x128xf32, #tpu.memory_space<vmem>>, vector<8x128xf32>
    tpu.vector_store %arg7[%c0_6, %c0_7], %7 {strides = array<i32>} : memref<8x128xf32, #tpu.memory_space<vmem>>, vector<8x128xf32>,
    %c0_i32_8 = arith.constant 0 : i32
    %9 = arith.cmpi eq, %arg2, %c0_i32_8 : i32
    %10 = arith.extui %9 : i1 to i32
    %c0_i32_9 = arith.constant 0 : i32
    %11 = arith.cmpi ne, %10, %c0_i32_9 : i32
    scf.if %11 {
      %c0_10 = arith.constant 0 : index
      %c0_11 = arith.constant 0 : index
      %12 = vector.load %arg7[%c0_10, %c0_11] : memref<8x128xf32, #tpu.memory_space<vmem>>, vector<8x128xf32>
      %cst_12 = arith.constant 2.000000e-01 : f32
      %13 = vector.broadcast %cst_12 : f32 to vector<8x128xf32>
      %14 = arith.mulf %13, %12 : vector<8x128xf32>
      %15 = arith.maximumf %12, %14 : vector<8x128xf32>
      %c0_13 = arith.constant 0 : index
      %c0_14 = arith.constant 0 : index
      %16 = vector.load %arg7[%c0_13, %c0_14] : memref<8x128xf32, #tpu.memory_space<vmem>>, vector<8x128xf32>
      tpu.vector_store %arg7[%c0_13, %c0_14], %15 {strides = array<i32>} : memref<8x128xf32, #tpu.memory_space<vmem>>, vector<8x128xf32>,
    } else {
    }
    return
  }
  func.func @transform_0(%arg0: i32, %arg1: i32, %arg2: i32, %arg3: memref<1xi32, #tpu.memory_space<smem>>) -> (i32, i32) {
    %c0_i32 = arith.constant 0 : i32
    return %arg0, %arg2 : i32, i32
  }
  func.func @transform_1(%arg0: i32, %arg1: i32, %arg2: i32, %arg3: memref<1xi32, #tpu.memory_space<smem>>) -> (i32, i32) {
    %c0_i32 = arith.constant 0 : i32
    return %arg2, %arg1 : i32, i32
  }
  func.func @transform_2(%arg0: i32, %arg1: i32, %arg2: i32, %arg3: memref<1xi32, #tpu.memory_space<smem>>) -> (i32, i32) {
    %c0_i32 = arith.constant 0 : i32
    %c0_i32_0 = arith.constant 0 : i32
    return %c0_i32, %arg1 : i32, i32
  }
  func.func @transform_3(%arg0: i32, %arg1: i32, %arg2: i32, %arg3: memref<1xi32, #tpu.memory_space<smem>>) -> (i32, i32) {
    %c0_i32 = arith.constant 0 : i32
    return %arg0, %arg1 : i32, i32
  }
}

</mosaic_0001>

<llo_original>
// kernel: tpu_custom_call.1
$region0: #{tpu_custom_call.1}
  #allocation0 [shape = 'u32[]', space=smem, size = 0x4, offset = 0x4, fixed_abs, tag = 'smem constant byte address 0x4 - core index']
  #allocation1 [shape = 'u32[72,128]{1,0:T(1,128)}', space=vmem, size = 0x9000, scoped, tag = 'internal scratch']
  #allocation2 [shape = 's32[1]{0}', space=sflag, size = 0x4, scoped, tag = 'scoped memory for tpu_custom_call.1']
  #allocation3 [shape = 's32[1]{0:T(128)S(6)}', space=smem, size = 0x200, scoped, tag = 'prefetched SMEM operand 0']
  %s0 = inlined_call_operand.<no memory space> [shape: s32[1], index: 0, kind: input, shape index: {}]
  %s1 = inlined_call_operand.hbm [shape: f32[8,128], index: 1, kind: input, shape index: {}]
  %s2 = inlined_call_operand.hbm [shape: f32[128,128], index: 2, kind: input, shape index: {}]
  %s3 = inlined_call_operand.vmem [shape: f32[1,128], index: 3, kind: input, shape index: {}]
  %s4 = inlined_call_operand.hbm [shape: f32[8,128], index: 4, kind: output, shape index: {}]
  %s5 = sld [smem:[#allocation0]]
  $region38: #{tpu_custom_call.1} parent=0
    _
  %s7 = ssub.s32 1, %s5
  %s8 = scalar_select 0, %s7, %s5
  %9 = sst [smem:[#allocation3]] %s0
  $region1: #{tpu_custom_call.1} parent=0
    #allocation4 [shape = 'u8[4096]{0}', space=vmem, size = 0x1000, scoped, tag = 'input window, operand 1, single buffered']
    #allocation5 [shape = 's32[1]{0}', space=sflag, size = 0x4, scoped, tag = 'scoped memory for tpu_custom_call.1']
    #allocation6 [shape = 's32[1]{0}', space=sflag, size = 0x4, scoped, tag = 'scoped memory for tpu_custom_call.1']
    #allocation7 [shape = 'u8[65536]{0}', space=vmem, size = 0x10000, scoped, tag = 'input window, operand 2, single buffered']
    #allocation8 [shape = 's32[1]{0}', space=sflag, size = 0x4, scoped, tag = 'scoped memory for tpu_custom_call.1']
    #allocation9 [shape = 'u8[4096]{0}', space=vmem, size = 0x1000, scoped, tag = 'output window, operand 0, single buffered']
    %10 = vsyncpa [#allocation5], 0
    %11 = vsyncpa [#allocation8], 0
    %12 = vsyncpa [#allocation6], 0
    // Predicated region
    $region2: #{tpu_custom_call.1} parent=1 // pred_check
      _
    $region3: #{tpu_custom_call.1} parent=1 // pred_check_branch
      %14 = sbr.rel (0) target = $region5
    $region4: #{tpu_custom_call.1} parent=1 // pred_region
      %16 = vsyncadd [#allocation5], 0
      %s18 = sshll.u32 %s1, 4
      %s19 = int_to_ptr.hbm [resolvable:$true] %s18
      %s20 = sshll.u32 [#allocation4], 4
      %s21 = int_to_ptr.vmem [resolvable:$true] %s20
      %23 = dma.hbm_to_vmem [thread:$0]  %s19, 128, %s21, [#allocation5]
    $region5: #{tpu_custom_call.1} parent=1 // pred_fallthru
      _
    // Predicated region
    $region6: #{tpu_custom_call.1} parent=1 // pred_check
      _
    $region7: #{tpu_custom_call.1} parent=1 // pred_check_branch
      %25 = sbr.rel (0) target = $region9
    $region8: #{tpu_custom_call.1} parent=1 // pred_region
      %27 = vsyncadd [#allocation8], 0
      %s28 = sshll.u32 %s2, 4
      %s29 = int_to_ptr.hbm [resolvable:$true] %s28
      %s30 = sshll.u32 [#allocation7], 4
      %s31 = int_to_ptr.vmem [resolvable:$true] %s30
      %36 = dma.hbm_to_vmem [thread:$0]  %s29, 2048, %s31, [#allocation8], 128, 128, 8
    $region9: #{tpu_custom_call.1} parent=1 // pred_fallthru
      _
    // Predicated region
    $region10: #{tpu_custom_call.1} parent=1 // pred_check
      _
    $region11: #{tpu_custom_call.1} parent=1 // pred_check_branch
      %38 = sbr.rel (0) target = $region13
    $region12: #{tpu_custom_call.1} parent=1 // pred_region
      _
    $region13: #{tpu_custom_call.1} parent=1 // pred_fallthru
      _
    // Predicated region
    $region14: #{tpu_custom_call.1} parent=1 // pred_check
      _
    $region15: #{tpu_custom_call.1} parent=1 // pred_check_branch
      %40 = sbr.rel (0) target = $region17
    $region16: #{tpu_custom_call.1} parent=1 // pred_region
      %42 = dma.done [#allocation5], 128
    $region17: #{tpu_custom_call.1} parent=1 // pred_fallthru
      _
    // Predicated region
    $region18: #{tpu_custom_call.1} parent=1 // pred_check
      _
    $region19: #{tpu_custom_call.1} parent=1 // pred_check_branch
      %44 = sbr.rel (0) target = $region21
    $region20: #{tpu_custom_call.1} parent=1 // pred_region
      %46 = dma.done [#allocation8], 2048
    $region21: #{tpu_custom_call.1} parent=1 // pred_fallthru
      _
    %p47 = scmp.eq.s32.totalorder 0, 0
    // Predicated region
    $region22: #{tpu_custom_call.1} parent=1 // pred_check
      %p48 = pneg %p47
    $region23: #{tpu_custom_call.1} parent=1 // pred_check_branch
      %50 = sbr.rel (%p48) target = $region25
    $region24: #{tpu_custom_call.1} parent=1 // pred_region
      %v51 = vld [vmem:[%s3] sm:$0x1]
      %v53 = vperm.slane %v51, 0
      %55 = vst [vmem:[#allocation9] sm:$0xff] %v53
    $region25: #{tpu_custom_call.1} parent=1 // pred_fallthru
      _
    %v56 = vld [vmem:[#allocation9] sm:$0xff]
    %v57 = vld [vmem:[#allocation4] sm:$0xff]
    %v58 = vld [vmem:[#allocation7] sm:$0xff]
    %v59 = vld [vmem:[#allocation7 + $0x8] sm:$0xff]
    %v60 = vld [vmem:[#allocation7 + $0x10] sm:$0xff]
    %v61 = vld [vmem:[#allocation7 + $0x18] sm:$0xff]
    %v62 = vld [vmem:[#allocation7 + $0x20] sm:$0xff]
    %v63 = vld [vmem:[#allocation7 + $0x28] sm:$0xff]
    %v64 = vld [vmem:[#allocation7 + $0x30] sm:$0xff]
    %v65 = vld [vmem:[#allocation7 + $0x38] sm:$0xff]
    %v66 = vld [vmem:[#allocation7 + $0x40] sm:$0xff]
    %v67 = vld [vmem:[#allocation7 + $0x48] sm:$0xff]
    %v68 = vld [vmem:[#allocation7 + $0x50] sm:$0xff]
    %v69 = vld [vmem:[#allocation7 + $0x58] sm:$0xff]
    %v70 = vld [vmem:[#allocation7 + $0x60] sm:$0xff]
    %v71 = vld [vmem:[#allocation7 + $0x68] sm:$0xff]
    %v72 = vld [vmem:[#allocation7 + $0x70] sm:$0xff]
    %v73 = vld [vmem:[#allocation7 + $0x78] sm:$0xff]
    %74 = vmatpush.msra.mxu0 %v73
    %75 = vmatpush.msra.mxu0 %v72
    %76 = vmatpush.msra.mxu0 %v71
    %77 = vmatpush.msra.mxu0 %v70
    %78 = vmatpush.msra.mxu0 %v69
    %79 = vmatpush.msra.mxu0 %v68
    %80 = vmatpush.msra.mxu0 %v67
    %81 = vmatpush.msra.mxu0 %v66
    %82 = vmatpush.msra.mxu0 %v65
    %83 = vmatpush.msra.mxu0 %v64
    %84 = vmatpush.msra.mxu0 %v63
    %85 = vmatpush.msra.mxu0 %v62
    %86 = vmatpush.msra.mxu0 %v61
    %87 = vmatpush.msra.mxu0 %v60
    %88 = vmatpush.msra.mxu0 %v59
    %89 = vmatpush.msra.mxu0 %v58
    %90 = vmatmul.f32.gmra.mxu0 %v57
    %v91 = vpop.f32.mrf.mxu0
    %v92 = vadd.f32 0.0, %v91
    %93 = vdwg.mxu0
    %v94 = vadd.f32 %v56, %v92
    %95 = vst [vmem:[#allocation9] sm:$0xff] %v94
    // Predicated region
    $region26: #{tpu_custom_call.1} parent=1 // pred_check
      %p96 = pneg %p47
    $region27: #{tpu_custom_call.1} parent=1 // pred_check_branch
      %98 = sbr.rel (%p96) target = $region29
    $region28: #{tpu_custom_call.1} parent=1 // pred_region
      %v99 = vld [vmem:[#allocation9] sm:$0xff]
      %v100 = vmul.f32 %v99, 0.2
      %v101 = vmax.f32 %v99, %v100
      %102 = vst [vmem:[#allocation9] sm:$0xff] %v101
    $region29: #{tpu_custom_call.1} parent=1 // pred_fallthru
      _
    // Predicated region
    $region30: #{tpu_custom_call.1} parent=1 // pred_check
      _
    $region31: #{tpu_custom_call.1} parent=1 // pred_check_branch
      %104 = sbr.rel (0) target = $region33
    $region32: #{tpu_custom_call.1} parent=1 // pred_region
      %106 = vsyncadd [#allocation6], 0
      %s108 = sshll.u32 [#allocation9], 4
      %s109 = int_to_ptr.vmem [resolvable:$true] %s108
      %s110 = sshll.u32 %s4, 4
      %s111 = int_to_ptr.hbm [resolvable:$true] %s110
      %113 = dma.vmem_to_hbm [thread:$0]  %s109, 128, %s111, [#allocation6]
    $region33: #{tpu_custom_call.1} parent=1 // pred_fallthru
      _
    // Predicated region
    $region34: #{tpu_custom_call.1} parent=1 // pred_check
      _
    $region35: #{tpu_custom_call.1} parent=1 // pred_check_branch
      %115 = sbr.rel (0) target = $region37
    $region36: #{tpu_custom_call.1} parent=1 // pred_region
      %117 = dma.done [#allocation6], 128
    $region37: #{tpu_custom_call.1} parent=1 // pred_fallthru
      _
    %118 = vsyncpa [#allocation5], 1
    %119 = vsyncpa [#allocation8], 1
    %120 = vsyncpa [#allocation6], 1

</llo_original>
